<compile_context>
chip_gen: v6e
topology: v6e:2x2x1
jax: 0.10.0
libtpu: 0.0.40
codegen_flags: <defaults>
</compile_context>

<pallas_src>
import jax
import jax.numpy as jnp
from jax.experimental import pallas as pl
from jax.experimental.pallas import tpu as pltpu


def adain_kernel(scale_ref, shift_ref, x_ref, out_ref):
    # scale_ref/shift_ref: (R, 1) f32  -- broadcast along the lane (HW) axis
    # x_ref/out_ref:       (R, HW)
    out_ref[...] = (x_ref[...] * scale_ref[...] + shift_ref[...]).astype(out_ref.dtype)


def _pick_row_block(rows, hw, itemsize, vmem_budget_bytes=8 * 1024 * 1024):
    """Largest multiple-of-8 divisor of `rows` whose (in+out, double-buffered)
    tiles stay within a conservative VMEM budget.  Falls back to the full
    extent when rows is not a multiple of 8 (full-extent blocks are always
    legal)."""
    if rows % 8 != 0:
        return rows
    # 2 arrays (x, out) x 2 pipeline buffers each.
    max_rows = max(8, vmem_budget_bytes // (4 * hw * itemsize))
    max_rows = min(max_rows, 1024)
    if rows <= max_rows:
        return rows
    best = 8
    cand = 8
    while cand <= max_rows:
        if rows % cand == 0:
            best = cand
        cand += 8
    return best


def adain_forward(x, latent_id, weight, bias):
    """x: (B, C, H, W), latent_id: (B, L),
    weight: (2C, L) (PyTorch nn.Linear layout), bias: (2C,)"""
    B, C, H, W = x.shape
    HW = H * W
    rows = B * C

    # ---- hoisted style linear (tiny; let XLA handle it) -------------------
    style = (latent_id.astype(jnp.float32) @ weight.astype(jnp.float32).T
             + bias.astype(jnp.float32))                       # (B, 2C)
    scale = (style[:, :C] + 1.0).reshape(rows, 1)              # gamma + 1, (B*C, 1) f32
    shift = style[:, C:].reshape(rows, 1)                      # beta,      (B*C, 1) f32

    x_flat = x.reshape(rows, HW)

    row_block = _pick_row_block(rows, HW, x.dtype.itemsize)
    grid = (rows // row_block,)

    out_flat = pl.pallas_call(
        adain_kernel,
        out_shape=jax.ShapeDtypeStruct((rows, HW), x.dtype),
        grid=grid,
        in_specs=[
            pl.BlockSpec((row_block, 1), lambda i: (i, 0)),    # scale
            pl.BlockSpec((row_block, 1), lambda i: (i, 0)),    # shift
            pl.BlockSpec((row_block, HW), lambda i: (i, 0)),   # x rows
        ],
        out_specs=pl.BlockSpec((row_block, HW), lambda i: (i, 0)),
        compiler_params=pltpu.CompilerParams(
            dimension_semantics=("parallel",)),
    )(scale, shift, x_flat)

    return out_flat.reshape(B, C, H, W)


def adain_reference(x, latent_id, weight, bias):
    B, C, H, W = x.shape
    style = latent_id @ weight.T + bias          # (B, 2C)
    style = style.reshape(B, 2, C, 1, 1)
    return x * (style[:, 0] + 1.0) + style[:, 1]


if __name__ == "__main__":
    B, C, H, W = 2, 4, 16, 16
    latent_size = 8

    key = jax.random.PRNGKey(0)
    kx, kz, kw, kb = jax.random.split(key, 4)

    x = jax.random.normal(kx, (B, C, H, W), dtype=jnp.float32)
    latent_id = jax.random.normal(kz, (B, latent_size), dtype=jnp.float32)
    # deterministic synthetic nn.Linear(latent_size, 2*C) parameters
    weight = jax.random.normal(kw, (2 * C, latent_size), dtype=jnp.float32) * 0.1
    bias = jax.random.normal(kb, (2 * C,), dtype=jnp.float32) * 0.1

    out = adain_forward(x, latent_id, weight, bias)
    out = jax.block_until_ready(out)

    ref = adain_reference(x, latent_id, weight, bias)
    assert out.shape == (B, C, H, W)
    assert jnp.allclose(out, ref, atol=1e-5, rtol=1e-5), "mismatch vs reference"

    print("KERNEL_OK")
</pallas_src>

<mosaic_0001>
module attributes {stable_mosaic.version = 11 : i64} {
  func.func @adain_kernel(%arg0: i32, %arg1: memref<8x1xf32, #tpu.memory_space<vmem>>, %arg2: memref<8x1xf32, #tpu.memory_space<vmem>>, %arg3: memref<8x256xf32, #tpu.memory_space<vmem>>, %arg4: memref<8x256xf32, #tpu.memory_space<vmem>>) attributes {dimension_semantics = [#tpu.dimension_semantics<parallel>], iteration_bounds = array<i64: 1>, scalar_prefetch = 0 : i64, scratch_operands = 0 : i64, tpu.core_type = #tpu.core_type<tc>, window_params = [{transform_indices = @transform_0, window_bounds = array<i64: 8, 1>}, {transform_indices = @transform_1, window_bounds = array<i64: 8, 1>}, {transform_indices = @transform_2, window_bounds = array<i64: 8, 256>}, {transform_indices = @transform_3, window_bounds = array<i64: 8, 256>}]} {
    %c0 = arith.constant 0 : index
    %c0_0 = arith.constant 0 : index
    %0 = vector.load %arg3[%c0, %c0_0] : memref<8x256xf32, #tpu.memory_space<vmem>>, vector<8x256xf32>
    %c0_1 = arith.constant 0 : index
    %c0_2 = arith.constant 0 : index
    %1 = vector.load %arg1[%c0_1, %c0_2] : memref<8x1xf32, #tpu.memory_space<vmem>>, vector<8x1xf32>
    %2 = vector.broadcast %1 : vector<8x1xf32> to vector<8x256xf32>
    %3 = arith.mulf %0, %2 : vector<8x256xf32>
    %c0_3 = arith.constant 0 : index
    %c0_4 = arith.constant 0 : index
    %4 = vector.load %arg2[%c0_3, %c0_4] : memref<8x1xf32, #tpu.memory_space<vmem>>, vector<8x1xf32>
    %5 = vector.broadcast %4 : vector<8x1xf32> to vector<8x256xf32>
    %6 = arith.addf %3, %5 : vector<8x256xf32>
    %c0_5 = arith.constant 0 : index
    %c0_6 = arith.constant 0 : index
    %7 = vector.load %arg4[%c0_5, %c0_6] : memref<8x256xf32, #tpu.memory_space<vmem>>, vector<8x256xf32>
    tpu.vector_store %arg4[%c0_5, %c0_6], %6 {strides = array<i32>} : memref<8x256xf32, #tpu.memory_space<vmem>>, vector<8x256xf32>,
    return
  }
  func.func @transform_0(%arg0: i32) -> (i32, i32) {
    %c0_i32 = arith.constant 0 : i32
    %c0_i32_0 = arith.constant 0 : i32
    return %arg0, %c0_i32 : i32, i32
  }
  func.func @transform_1(%arg0: i32) -> (i32, i32) {
    %c0_i32 = arith.constant 0 : i32
    %c0_i32_0 = arith.constant 0 : i32
    return %arg0, %c0_i32 : i32, i32
  }
  func.func @transform_2(%arg0: i32) -> (i32, i32) {
    %c0_i32 = arith.constant 0 : i32
    %c0_i32_0 = arith.constant 0 : i32
    return %arg0, %c0_i32 : i32, i32
  }
  func.func @transform_3(%arg0: i32) -> (i32, i32) {
    %c0_i32 = arith.constant 0 : i32
    %c0_i32_0 = arith.constant 0 : i32
    return %arg0, %c0_i32 : i32, i32
  }
}

</mosaic_0001>

<llo_original>
// kernel: tpu_custom_call.1
$region0: #{tpu_custom_call.1}
  #allocation0 [shape = 'u32[]', space=smem, size = 0x4, offset = 0x4, fixed_abs, tag = 'smem constant byte address 0x4 - core index']
  #allocation1 [shape = 'u32[144,128]{1,0:T(1,128)}', space=vmem, size = 0x12000, scoped, tag = 'internal scratch']
  %s0 = inlined_call_operand.vmem [shape: f32[8,1], index: 0, kind: input, shape index: {}]
  %s1 = inlined_call_operand.vmem [shape: f32[8,1], index: 1, kind: input, shape index: {}]
  %s2 = inlined_call_operand.vmem [shape: f32[8,256], index: 2, kind: input, shape index: {}]
  %s3 = inlined_call_operand.hbm [shape: f32[8,256], index: 3, kind: output, shape index: {}]
  %s4 = sld [smem:[#allocation0]]
  $region22: #{tpu_custom_call.1} parent=0
    _
  %s6 = ssub.s32 1, %s4
  %s7 = scalar_select 0, %s6, %s4
  $region1: #{tpu_custom_call.1} parent=0
    #allocation2 [shape = 'u8[8192]{0}', space=vmem, size = 0x2000, scoped, tag = 'output window, operand 0, single buffered']
    #allocation3 [shape = 's32[1]{0}', space=sflag, size = 0x4, scoped, tag = 'scoped memory for tpu_custom_call.1']
    %8 = vsyncpa [#allocation3], 0
    // Predicated region
    $region2: #{tpu_custom_call.1} parent=1 // pred_check
      _
    $region3: #{tpu_custom_call.1} parent=1 // pred_check_branch
      %10 = sbr.rel (0) target = $region5
    $region4: #{tpu_custom_call.1} parent=1 // pred_region
      _
    $region5: #{tpu_custom_call.1} parent=1 // pred_fallthru
      _
    // Predicated region
    $region6: #{tpu_custom_call.1} parent=1 // pred_check
      _
    $region7: #{tpu_custom_call.1} parent=1 // pred_check_branch
      %12 = sbr.rel (0) target = $region9
    $region8: #{tpu_custom_call.1} parent=1 // pred_region
      _
    $region9: #{tpu_custom_call.1} parent=1 // pred_fallthru
      _
    // Predicated region
    $region10: #{tpu_custom_call.1} parent=1 // pred_check
      _
    $region11: #{tpu_custom_call.1} parent=1 // pred_check_branch
      %14 = sbr.rel (0) target = $region13
    $region12: #{tpu_custom_call.1} parent=1 // pred_region
      _
    $region13: #{tpu_custom_call.1} parent=1 // pred_fallthru
      _
    %v15 = vld [vmem:[%s2] sm:$0xff]
    %v16 = vld [vmem:[%s2 + $0x8] sm:$0xff]
    %v17 = vld [vmem:[%s0] sm:$0xff]
    %19 = vset.pattern.permute.xlu0 0
    %20 = vperm.xlu0 %19, %v17
    %v21 = vpop.permute.xlu0 %20
    %v23 = vmul.f32 %v15, %v21
    %v24 = vmul.f32 %v16, %v21
    %v25 = vld [vmem:[%s1] sm:$0xff]
    %27 = vset.pattern.permute.xlu0 0
    %28 = vperm.xlu0 %27, %v25
    %v29 = vpop.permute.xlu0 %28
    %v31 = vadd.f32 %v23, %v29
    %v32 = vadd.f32 %v24, %v29
    %33 = vst [vmem:[#allocation2] sm:$0xff] %v31
    %34 = vst [vmem:[#allocation2 + $0x8] sm:$0xff] %v32
    // Predicated region
    $region14: #{tpu_custom_call.1} parent=1 // pred_check
      _
    $region15: #{tpu_custom_call.1} parent=1 // pred_check_branch
      %36 = sbr.rel (0) target = $region17
    $region16: #{tpu_custom_call.1} parent=1 // pred_region
      %s38 = ssub.s32 256, 256
      %39 = vsyncadd [#allocation3], %s38
      %s41 = sshll.u32 [#allocation2], 4
      %s42 = int_to_ptr.vmem [resolvable:$true] %s41
      %44 = dma.vmem_to_hbm [thread:$0]  %s42, 256, %s3, [#allocation3]
    $region17: #{tpu_custom_call.1} parent=1 // pred_fallthru
      _
    // Predicated region
    $region18: #{tpu_custom_call.1} parent=1 // pred_check
      _
    $region19: #{tpu_custom_call.1} parent=1 // pred_check_branch
      %46 = sbr.rel (0) target = $region21
    $region20: #{tpu_custom_call.1} parent=1 // pred_region
      %47 = dma.done [#allocation3], 256
    $region21: #{tpu_custom_call.1} parent=1 // pred_fallthru
      _
    %48 = vsyncpa [#allocation3], 1

</llo_original>
